<compile_context>
chip_gen: v7x
topology: tpu7x:2x2x1
jax: 0.10.0
libtpu: 0.0.40
codegen_flags: <defaults>
</compile_context>

<pallas_src>
import functools

import jax
import jax.numpy as jnp
from jax import lax
from jax.experimental import pallas as pl
from jax.experimental.pallas import tpu as pltpu


def _round_up(x, m):
    return (x + m - 1) // m * m


def mlp_kernel(
    x_ref,
    w1_ref, t1_ref,
    w2_ref, t2_ref,
    w3_ref, t3_ref,
    w4_ref, t4_ref,
    wo_ref, bo_ref,
    logits_ref, probas_ref,
    *, num_classes,
):
    # Activations enter each matmul as bf16 (MXU-friendly); accumulation and
    # elementwise math stay f32.
    x = x_ref[...].astype(jnp.bfloat16)

    def layer(h, w_ref, t_ref):
        a = jnp.dot(h, w_ref[...], preferred_element_type=jnp.float32) + t_ref[...]
        a = jnp.maximum(a, 0.0)
        return a.astype(jnp.bfloat16)

    h = layer(x, w1_ref, t1_ref)
    h = layer(h, w2_ref, t2_ref)   # dropout(p=0.2) is identity in eval mode
    h = layer(h, w3_ref, t3_ref)   # dropout(p=0.2) is identity in eval mode
    h = layer(h, w4_ref, t4_ref)

    # Output layer (class axis padded to 128 lanes for lane-dense stores).
    logits = jnp.dot(h, wo_ref[...], preferred_element_type=jnp.float32) + bo_ref[...]
    logits_ref[...] = logits.astype(logits_ref.dtype)

    # Masked softmax over the real class columns only (padded columns carry
    # logit 0, so they must be excluded from max / sum).
    col = lax.broadcasted_iota(jnp.int32, logits.shape, 1)
    valid = col < num_classes
    masked = jnp.where(valid, logits, jnp.float32(-1e30))
    m = jnp.max(masked, axis=1, keepdims=True)
    e = jnp.where(valid, jnp.exp(masked - m), 0.0)
    denom = jnp.sum(e, axis=1, keepdims=True)
    probas_ref[...] = (e / denom).astype(probas_ref.dtype)


@functools.partial(jax.jit, static_argnames=("num_classes", "tile_b"))
def mlp_forward(x, params, *, num_classes, tile_b=256):
    B, F = x.shape
    c_pad = params["wo"].shape[1]   # class axis padded to a multiple of 128

    # Choose a batch tile (multiple of 8 sublanes) and pad the batch to it.
    tile_b = min(tile_b, _round_up(B, 8))
    b_pad = _round_up(B, tile_b)
    if b_pad != B:
        x = jnp.pad(x, ((0, b_pad - B), (0, 0)))

    grid = (b_pad // tile_b,)

    def resident(shape):
        # Whole array, same block every grid step -> stays resident in VMEM.
        return pl.BlockSpec(shape, lambda i: (0,) * len(shape))

    operands = (
        x,
        params["w1"], params["t1"],
        params["w2"], params["t2"],
        params["w3"], params["t3"],
        params["w4"], params["t4"],
        params["wo"], params["bo"],
    )
    in_specs = [pl.BlockSpec((tile_b, F), lambda i: (i, 0))]
    in_specs += [resident(op.shape) for op in operands[1:]]

    out_specs = (
        pl.BlockSpec((tile_b, c_pad), lambda i: (i, 0)),
        pl.BlockSpec((tile_b, c_pad), lambda i: (i, 0)),
    )
    out_shape = (
        jax.ShapeDtypeStruct((b_pad, c_pad), jnp.float32),
        jax.ShapeDtypeStruct((b_pad, c_pad), jnp.float32),
    )

    logits_p, probas_p = pl.pallas_call(
        functools.partial(mlp_kernel, num_classes=num_classes),
        out_shape=out_shape,
        grid=grid,
        in_specs=in_specs,
        out_specs=out_specs,
        compiler_params=pltpu.CompilerParams(
            dimension_semantics=("parallel",),
        ),
    )(*operands)

    return logits_p[:B, :num_classes], probas_p[:B, :num_classes]


def init_params(key, num_features, h1, h2, h3, h4, num_classes, eps=1e-5):
    """Deterministic init mirroring the PyTorch module, with BN folded.

    Linear weights are stored as [in, out] (PyTorch computes x @ W.T with
    W [out, in]; values are identical).  BatchNorm1d uses PyTorch defaults
    (gamma=1, beta=0, running_mean=0, running_var=1) and is folded into the
    weights/bias.  Weights are cast to bf16 after folding; biases stay f32.
    The output layer's class axis is zero-padded to a multiple of 128.
    """
    dims = [(num_features, h1), (h1, h2), (h2, h3), (h3, h4), (h4, num_classes)]
    names = ["1", "2", "3", "4", "o"]
    keys = jax.random.split(key, 2 * len(dims))
    params = {}
    for i, ((din, dout), name) in enumerate(zip(dims, names)):
        bound = 1.0 / jnp.sqrt(din)
        w = jax.random.uniform(keys[2 * i], (din, dout), jnp.float32, -bound, bound)
        b = jax.random.uniform(keys[2 * i + 1], (1, dout), jnp.float32, -bound, bound)
        if name != "o":
            gamma = jnp.ones((1, dout), jnp.float32)
            beta = jnp.zeros((1, dout), jnp.float32)
            running_mean = jnp.zeros((1, dout), jnp.float32)
            running_var = jnp.ones((1, dout), jnp.float32)
            scale = gamma / jnp.sqrt(running_var + eps)
            shift = beta - running_mean * scale
            w_fold = w * scale            # fold BN scale into weight columns
            t_fold = b * scale + shift    # fold bias + BN shift
            params["w" + name] = w_fold.astype(jnp.bfloat16)
            params["t" + name] = t_fold.astype(jnp.float32)
        else:
            c_pad = _round_up(dout, 128)
            wo = jnp.zeros((din, c_pad), jnp.float32).at[:, :dout].set(w)
            bo = jnp.zeros((1, c_pad), jnp.float32).at[:, :dout].set(b)
            params["wo"] = wo.astype(jnp.bfloat16)
            params["bo"] = bo.astype(jnp.float32)
    return params


def _reference_forward(x, params, num_classes):
    """Pure-JAX reference using the same folded / bf16 parameters."""
    h = x.astype(jnp.bfloat16)
    for n in ("1", "2", "3", "4"):
        a = jnp.dot(h, params["w" + n], preferred_element_type=jnp.float32)
        a = a + params["t" + n]
        h = jnp.maximum(a, 0.0).astype(jnp.bfloat16)
    logits = jnp.dot(h, params["wo"], preferred_element_type=jnp.float32)
    logits = (logits + params["bo"])[:, :num_classes]
    probas = jax.nn.softmax(logits, axis=1)
    return logits, probas


if __name__ == "__main__":
    # Small shapes consistent with the module's forward pass.
    batch = 8
    num_features = 32
    h1, h2, h3, h4 = 64, 64, 32, 32
    num_classes = 10

    key = jax.random.PRNGKey(0)
    k_x, k_p = jax.random.split(key)
    x = jax.random.normal(k_x, (batch, num_features), dtype=jnp.float32)
    params = init_params(k_p, num_features, h1, h2, h3, h4, num_classes)

    logits, probas = mlp_forward(x, params, num_classes=num_classes)
    jax.block_until_ready((logits, probas))

    ref_logits, ref_probas = _reference_forward(x, params, num_classes)

    assert logits.shape == (batch, num_classes)
    assert probas.shape == (batch, num_classes)
    # Softmax rows sum to 1 (exact f32 divide in the epilogue).
    assert bool(jnp.allclose(jnp.sum(probas, axis=1), 1.0, atol=1e-3))
    # Matches the pure-JAX reference with the same folded bf16 parameters.
    assert bool(jnp.allclose(logits, ref_logits, atol=2e-2, rtol=2e-2))
    assert bool(jnp.allclose(probas, ref_probas, atol=2e-2, rtol=2e-2))

    print("KERNEL_OK")
</pallas_src>

<mosaic_0001>
module attributes {stable_mosaic.version = 11 : i64} {
  func.func @mlp_kernel(%arg0: i32, %arg1: memref<8x32xf32, #tpu.memory_space<vmem>>, %arg2: memref<32x64xbf16, #tpu.memory_space<vmem>>, %arg3: memref<1x64xf32, #tpu.memory_space<vmem>>, %arg4: memref<64x64xbf16, #tpu.memory_space<vmem>>, %arg5: memref<1x64xf32, #tpu.memory_space<vmem>>, %arg6: memref<64x32xbf16, #tpu.memory_space<vmem>>, %arg7: memref<1x32xf32, #tpu.memory_space<vmem>>, %arg8: memref<32x32xbf16, #tpu.memory_space<vmem>>, %arg9: memref<1x32xf32, #tpu.memory_space<vmem>>, %arg10: memref<32x128xbf16, #tpu.memory_space<vmem>>, %arg11: memref<1x128xf32, #tpu.memory_space<vmem>>, %arg12: memref<8x128xf32, #tpu.memory_space<vmem>>, %arg13: memref<8x128xf32, #tpu.memory_space<vmem>>) attributes {dimension_semantics = [#tpu.dimension_semantics<parallel>], iteration_bounds = array<i64: 1>, scalar_prefetch = 0 : i64, scratch_operands = 0 : i64, tpu.core_type = #tpu.core_type<tc>, window_params = [{transform_indices = @transform_0, window_bounds = array<i64: 8, 32>}, {pipeline_mode = #tpu.pipeline_mode<synchronous>, transform_indices = @transform_1, window_bounds = array<i64: 32, 64>}, {pipeline_mode = #tpu.pipeline_mode<synchronous>, transform_indices = @transform_2, window_bounds = array<i64: 1, 64>}, {pipeline_mode = #tpu.pipeline_mode<synchronous>, transform_indices = @transform_3, window_bounds = array<i64: 64, 64>}, {pipeline_mode = #tpu.pipeline_mode<synchronous>, transform_indices = @transform_4, window_bounds = array<i64: 1, 64>}, {pipeline_mode = #tpu.pipeline_mode<synchronous>, transform_indices = @transform_5, window_bounds = array<i64: 64, 32>}, {pipeline_mode = #tpu.pipeline_mode<synchronous>, transform_indices = @transform_6, window_bounds = array<i64: 1, 32>}, {pipeline_mode = #tpu.pipeline_mode<synchronous>, transform_indices = @transform_7, window_bounds = array<i64: 32, 32>}, {pipeline_mode = #tpu.pipeline_mode<synchronous>, transform_indices = @transform_8, window_bounds = array<i64: 1, 32>}, {pipeline_mode = #tpu.pipeline_mode<synchronous>, transform_indices = @transform_9, window_bounds = array<i64: 32, 128>}, {pipeline_mode = #tpu.pipeline_mode<synchronous>, transform_indices = @transform_10, window_bounds = array<i64: 1, 128>}, {transform_indices = @transform_11, window_bounds = array<i64: 8, 128>}, {transform_indices = @transform_12, window_bounds = array<i64: 8, 128>}]} {
    %c0 = arith.constant 0 : index
    %c0_0 = arith.constant 0 : index
    %0 = vector.load %arg1[%c0, %c0_0] : memref<8x32xf32, #tpu.memory_space<vmem>>, vector<8x32xf32>
    %1 = arith.truncf %0 : vector<8x32xf32> to vector<8x32xbf16>
    %c0_1 = arith.constant 0 : index
    %c0_2 = arith.constant 0 : index
    %2 = vector.load %arg2[%c0_1, %c0_2] : memref<32x64xbf16, #tpu.memory_space<vmem>>, vector<32x64xbf16>
    %cst = arith.constant dense<0.000000e+00> : vector<8x64xf32>
    %3 = tpu.matmul %1, %2, %cst {dimension_numbers = #tpu.dot_dimension_numbers<[1], [0], [0], [1], [0, 0, 1, 1], [], []>} : vector<8x32xbf16>, vector<32x64xbf16>, vector<8x64xf32> -> vector<8x64xf32>
    %c0_3 = arith.constant 0 : index
    %c0_4 = arith.constant 0 : index
    %4 = vector.load %arg3[%c0_3, %c0_4] : memref<1x64xf32, #tpu.memory_space<vmem>>, vector<1x64xf32>
    %5 = vector.broadcast %4 : vector<1x64xf32> to vector<8x64xf32>
    %6 = arith.addf %3, %5 : vector<8x64xf32>
    %cst_5 = arith.constant 0.000000e+00 : f32
    %7 = vector.broadcast %cst_5 : f32 to vector<8x64xf32>
    %8 = arith.maximumf %6, %7 : vector<8x64xf32>
    %9 = arith.truncf %8 : vector<8x64xf32> to vector<8x64xbf16>
    %c0_6 = arith.constant 0 : index
    %c0_7 = arith.constant 0 : index
    %10 = vector.load %arg4[%c0_6, %c0_7] : memref<64x64xbf16, #tpu.memory_space<vmem>>, vector<64x64xbf16>
    %cst_8 = arith.constant dense<0.000000e+00> : vector<8x64xf32>
    %11 = tpu.matmul %9, %10, %cst_8 {dimension_numbers = #tpu.dot_dimension_numbers<[1], [0], [0], [1], [0, 0, 1, 1], [], []>} : vector<8x64xbf16>, vector<64x64xbf16>, vector<8x64xf32> -> vector<8x64xf32>
    %c0_9 = arith.constant 0 : index
    %c0_10 = arith.constant 0 : index
    %12 = vector.load %arg5[%c0_9, %c0_10] : memref<1x64xf32, #tpu.memory_space<vmem>>, vector<1x64xf32>
    %13 = vector.broadcast %12 : vector<1x64xf32> to vector<8x64xf32>
    %14 = arith.addf %11, %13 : vector<8x64xf32>
    %cst_11 = arith.constant 0.000000e+00 : f32
    %15 = vector.broadcast %cst_11 : f32 to vector<8x64xf32>
    %16 = arith.maximumf %14, %15 : vector<8x64xf32>
    %17 = arith.truncf %16 : vector<8x64xf32> to vector<8x64xbf16>
    %c0_12 = arith.constant 0 : index
    %c0_13 = arith.constant 0 : index
    %18 = vector.load %arg6[%c0_12, %c0_13] : memref<64x32xbf16, #tpu.memory_space<vmem>>, vector<64x32xbf16>
    %cst_14 = arith.constant dense<0.000000e+00> : vector<8x32xf32>
    %19 = tpu.matmul %17, %18, %cst_14 {dimension_numbers = #tpu.dot_dimension_numbers<[1], [0], [0], [1], [0, 0, 1, 1], [], []>} : vector<8x64xbf16>, vector<64x32xbf16>, vector<8x32xf32> -> vector<8x32xf32>
    %c0_15 = arith.constant 0 : index
    %c0_16 = arith.constant 0 : index
    %20 = vector.load %arg7[%c0_15, %c0_16] : memref<1x32xf32, #tpu.memory_space<vmem>>, vector<1x32xf32>
    %21 = vector.broadcast %20 : vector<1x32xf32> to vector<8x32xf32>
    %22 = arith.addf %19, %21 : vector<8x32xf32>
    %cst_17 = arith.constant 0.000000e+00 : f32
    %23 = vector.broadcast %cst_17 : f32 to vector<8x32xf32>
    %24 = arith.maximumf %22, %23 : vector<8x32xf32>
    %25 = arith.truncf %24 : vector<8x32xf32> to vector<8x32xbf16>
    %c0_18 = arith.constant 0 : index
    %c0_19 = arith.constant 0 : index
    %26 = vector.load %arg8[%c0_18, %c0_19] : memref<32x32xbf16, #tpu.memory_space<vmem>>, vector<32x32xbf16>
    %cst_20 = arith.constant dense<0.000000e+00> : vector<8x32xf32>
    %27 = tpu.matmul %25, %26, %cst_20 {dimension_numbers = #tpu.dot_dimension_numbers<[1], [0], [0], [1], [0, 0, 1, 1], [], []>} : vector<8x32xbf16>, vector<32x32xbf16>, vector<8x32xf32> -> vector<8x32xf32>
    %c0_21 = arith.constant 0 : index
    %c0_22 = arith.constant 0 : index
    %28 = vector.load %arg9[%c0_21, %c0_22] : memref<1x32xf32, #tpu.memory_space<vmem>>, vector<1x32xf32>
    %29 = vector.broadcast %28 : vector<1x32xf32> to vector<8x32xf32>
    %30 = arith.addf %27, %29 : vector<8x32xf32>
    %cst_23 = arith.constant 0.000000e+00 : f32
    %31 = vector.broadcast %cst_23 : f32 to vector<8x32xf32>
    %32 = arith.maximumf %30, %31 : vector<8x32xf32>
    %33 = arith.truncf %32 : vector<8x32xf32> to vector<8x32xbf16>
    %c0_24 = arith.constant 0 : index
    %c0_25 = arith.constant 0 : index
    %34 = vector.load %arg10[%c0_24, %c0_25] : memref<32x128xbf16, #tpu.memory_space<vmem>>, vector<32x128xbf16>
    %cst_26 = arith.constant dense<0.000000e+00> : vector<8x128xf32>
    %35 = tpu.matmul %33, %34, %cst_26 {dimension_numbers = #tpu.dot_dimension_numbers<[1], [0], [0], [1], [0, 0, 1, 1], [], []>} : vector<8x32xbf16>, vector<32x128xbf16>, vector<8x128xf32> -> vector<8x128xf32>
    %c0_27 = arith.constant 0 : index
    %c0_28 = arith.constant 0 : index
    %36 = vector.load %arg11[%c0_27, %c0_28] : memref<1x128xf32, #tpu.memory_space<vmem>>, vector<1x128xf32>
    %37 = vector.broadcast %36 : vector<1x128xf32> to vector<8x128xf32>
    %38 = arith.addf %35, %37 : vector<8x128xf32>
    %c0_29 = arith.constant 0 : index
    %c0_30 = arith.constant 0 : index
    %39 = vector.load %arg12[%c0_29, %c0_30] : memref<8x128xf32, #tpu.memory_space<vmem>>, vector<8x128xf32>
    tpu.vector_store %arg12[%c0_29, %c0_30], %38 {strides = array<i32>} : memref<8x128xf32, #tpu.memory_space<vmem>>, vector<8x128xf32>,
    %40 = tpu.iota {dimensions = array<i32: 1>} : vector<8x128xi32>
    %c10_i32 = arith.constant 10 : i32
    %41 = vector.broadcast %c10_i32 : i32 to vector<8x128xi32>
    %42 = arith.cmpi slt, %40, %41 : vector<8x128xi32>
    %cst_31 = arith.constant -1.000000e+30 : f32
    %43 = vector.broadcast %cst_31 : f32 to vector<8x128xf32>
    %44 = arith.select %42, %38, %43 : vector<8x128xi1>, vector<8x128xf32>
    %cst_32 = arith.constant dense<0xFF800000> : vector<8xf32>
    %45 = vector.multi_reduction <maximumf>, %44, %cst_32 [1] : vector<8x128xf32> to vector<8xf32>
    %46 = vector.shape_cast %45 : vector<8xf32> to vector<8x1xf32>
    %47 = vector.broadcast %46 : vector<8x1xf32> to vector<8x128xf32>
    %48 = arith.subf %44, %47 : vector<8x128xf32>
    %49 = math.exp %48 : vector<8x128xf32>
    %cst_33 = arith.constant 0.000000e+00 : f32
    %50 = vector.broadcast %cst_33 : f32 to vector<8x128xf32>
    %51 = arith.select %42, %49, %50 : vector<8x128xi1>, vector<8x128xf32>
    %cst_34 = arith.constant dense<0.000000e+00> : vector<8xf32>
    %52 = vector.multi_reduction <add>, %51, %cst_34 [1] : vector<8x128xf32> to vector<8xf32>
    %53 = vector.shape_cast %52 : vector<8xf32> to vector<8x1xf32>
    %54 = vector.broadcast %53 : vector<8x1xf32> to vector<8x128xf32>
    %55 = arith.divf %51, %54 : vector<8x128xf32>
    %c0_35 = arith.constant 0 : index
    %c0_36 = arith.constant 0 : index
    %56 = vector.load %arg13[%c0_35, %c0_36] : memref<8x128xf32, #tpu.memory_space<vmem>>, vector<8x128xf32>
    tpu.vector_store %arg13[%c0_35, %c0_36], %55 {strides = array<i32>} : memref<8x128xf32, #tpu.memory_space<vmem>>, vector<8x128xf32>,
    return
  }
  func.func @transform_0(%arg0: i32) -> (i32, i32) {
    %c0_i32 = arith.constant 0 : i32
    %c0_i32_0 = arith.constant 0 : i32
    return %arg0, %c0_i32 : i32, i32
  }
  func.func @transform_1(%arg0: i32) -> (i32, i32) {
    %c0_i32 = arith.constant 0 : i32
    %c0_i32_0 = arith.constant 0 : i32
    %c0_i32_1 = arith.constant 0 : i32
    return %c0_i32, %c0_i32_0 : i32, i32
  }
  func.func @transform_2(%arg0: i32) -> (i32, i32) {
    %c0_i32 = arith.constant 0 : i32
    %c0_i32_0 = arith.constant 0 : i32
    %c0_i32_1 = arith.constant 0 : i32
    return %c0_i32, %c0_i32_0 : i32, i32
  }
  func.func @transform_3(%arg0: i32) -> (i32, i32) {
    %c0_i32 = arith.constant 0 : i32
    %c0_i32_0 = arith.constant 0 : i32
    %c0_i32_1 = arith.constant 0 : i32
    return %c0_i32, %c0_i32_0 : i32, i32
  }
  func.func @transform_4(%arg0: i32) -> (i32, i32) {
    %c0_i32 = arith.constant 0 : i32
    %c0_i32_0 = arith.constant 0 : i32
    %c0_i32_1 = arith.constant 0 : i32
    return %c0_i32, %c0_i32_0 : i32, i32
  }
  func.func @transform_5(%arg0: i32) -> (i32, i32) {
    %c0_i32 = arith.constant 0 : i32
    %c0_i32_0 = arith.constant 0 : i32
    %c0_i32_1 = arith.constant 0 : i32
    return %c0_i32, %c0_i32_0 : i32, i32
  }
  func.func @transform_6(%arg0: i32) -> (i32, i32) {
    %c0_i32 = arith.constant 0 : i32
    %c0_i32_0 = arith.constant 0 : i32
    %c0_i32_1 = arith.constant 0 : i32
    return %c0_i32, %c0_i32_0 : i32, i32
  }
  func.func @transform_7(%arg0: i32) -> (i32, i32) {
    %c0_i32 = arith.constant 0 : i32
    %c0_i32_0 = arith.constant 0 : i32
    %c0_i32_1 = arith.constant 0 : i32
    return %c0_i32, %c0_i32_0 : i32, i32
  }
  func.func @transform_8(%arg0: i32) -> (i32, i32) {
    %c0_i32 = arith.constant 0 : i32
    %c0_i32_0 = arith.constant 0 : i32
    %c0_i32_1 = arith.constant 0 : i32
    return %c0_i32, %c0_i32_0 : i32, i32
  }
  func.func @transform_9(%arg0: i32) -> (i32, i32) {
    %c0_i32 = arith.constant 0 : i32
    %c0_i32_0 = arith.constant 0 : i32
    %c0_i32_1 = arith.constant 0 : i32
    return %c0_i32, %c0_i32_0 : i32, i32
  }
  func.func @transform_10(%arg0: i32) -> (i32, i32) {
    %c0_i32 = arith.constant 0 : i32
    %c0_i32_0 = arith.constant 0 : i32
    %c0_i32_1 = arith.constant 0 : i32
    return %c0_i32, %c0_i32_0 : i32, i32
  }
  func.func @transform_11(%arg0: i32) -> (i32, i32) {
    %c0_i32 = arith.constant 0 : i32
    %c0_i32_0 = arith.constant 0 : i32
    return %arg0, %c0_i32 : i32, i32
  }
  func.func @transform_12(%arg0: i32) -> (i32, i32) {
    %c0_i32 = arith.constant 0 : i32
    %c0_i32_0 = arith.constant 0 : i32
    return %arg0, %c0_i32 : i32, i32
  }
}

</mosaic_0001>

<llo_original>
// kernel: mlp_forward.1
$region0: #{mlp_forward.1}
  #allocation0 [shape = 'u32[]', space=smem, size = 0x4, offset = 0x4, fixed_abs, tag = 'smem constant byte address 0x4 - core index']
  #allocation1 [shape = 'u32[144,128]{1,0:T(1,128)}', space=vmem, size = 0x12000, scoped, tag = 'internal scratch']
  %s0 = inlined_call_operand.hbm [shape: f32[8,32], index: 0, kind: input, shape index: {}]
  %s1 = inlined_call_operand.vmem [shape: bf16[32,64], index: 1, kind: input, shape index: {}]
  %s2 = inlined_call_operand.vmem [shape: f32[1,64], index: 2, kind: input, shape index: {}]
  %s3 = inlined_call_operand.vmem [shape: bf16[64,64], index: 3, kind: input, shape index: {}]
  %s4 = inlined_call_operand.vmem [shape: f32[1,64], index: 4, kind: input, shape index: {}]
  %s5 = inlined_call_operand.vmem [shape: bf16[64,32], index: 5, kind: input, shape index: {}]
  %s6 = inlined_call_operand.hbm [shape: f32[1,32], index: 6, kind: input, shape index: {}]
  %s7 = inlined_call_operand.vmem [shape: bf16[32,32], index: 7, kind: input, shape index: {}]
  %s8 = inlined_call_operand.hbm [shape: f32[1,32], index: 8, kind: input, shape index: {}]
  %s9 = inlined_call_operand.hbm [shape: bf16[32,128], index: 9, kind: input, shape index: {}]
  %s10 = inlined_call_operand.hbm [shape: f32[1,128], index: 10, kind: input, shape index: {}]
  %s11 = inlined_call_operand.hbm [shape: f32[8,128], index: 11, kind: output, shape index: {0}]
  %s12 = inlined_call_operand.hbm [shape: f32[8,128], index: 12, kind: output, shape index: {1}]
  %13 = xla_tuple %s11, %s12
  %s14 = sld [smem:[#allocation0]]
  $region82: #{mlp_forward.1} parent=0
    _
  %s16 = ssub.s32 1, %s14
  %s17 = scalar_select 0, %s16, %s14
  $region1: #{mlp_forward.1} parent=0
    #allocation2 [shape = 'u8[4096]{0}', space=vmem, size = 0x1000, scoped, tag = 'input window, operand 0, single buffered']
    #allocation3 [shape = 's32[1]{0}', space=sflag, size = 0x4, scoped, tag = 'scoped memory for mlp_forward.1']
    #allocation4 [shape = 's32[1]{0}', space=sflag, size = 0x4, scoped, tag = 'scoped memory for mlp_forward.1']
    #allocation5 [shape = 'u8[512]{0}', space=vmem, size = 0x400, scoped, tag = 'input window, operand 6, single buffered']
    #allocation6 [shape = 's32[1]{0}', space=sflag, size = 0x4, scoped, tag = 'scoped memory for mlp_forward.1']
    #allocation7 [shape = 'u8[512]{0}', space=vmem, size = 0x400, scoped, tag = 'input window, operand 8, single buffered']
    #allocation8 [shape = 'u8[8192]{0}', space=vmem, size = 0x2000, scoped, tag = 'input window, operand 9, single buffered']
    #allocation9 [shape = 's32[1]{0}', space=sflag, size = 0x4, scoped, tag = 'scoped memory for mlp_forward.1']
    #allocation10 [shape = 'u8[512]{0}', space=vmem, size = 0x400, scoped, tag = 'input window, operand 10, single buffered']
    #allocation11 [shape = 'u8[4096]{0}', space=vmem, size = 0x1000, scoped, tag = 'output window, operand 0, single buffered']
    #allocation12 [shape = 'u8[4096]{0}', space=vmem, size = 0x1000, scoped, tag = 'output window, operand 1, single buffered']
    #allocation13 [shape = 's32[1]{0}', space=sflag, size = 0x4, scoped, tag = 'scoped memory for mlp_forward.1']
    %18 = vsyncpa [#allocation3], 0
    %19 = vsyncpa [#allocation6], 0
    %20 = vsyncpa [#allocation9], 0
    %21 = vsyncpa [#allocation4], 0
    %22 = vsyncpa [#allocation13], 0
    // Predicated region
    $region2: #{mlp_forward.1} parent=1 // pred_check
      _
    $region3: #{mlp_forward.1} parent=1 // pred_check_branch
      %24 = sbr.rel (0) target = $region5
    $region4: #{mlp_forward.1} parent=1 // pred_region
      %s26 = ssub.s32 128, 128
      %27 = vsyncadd [#allocation3], %s26
      %s29 = sshll.u32 [#allocation2], 4
      %s30 = int_to_ptr.vmem [resolvable:$true] %s29
      %32 = dma.hbm_to_vmem [thread:$0]  %s0, 128, %s30, [#allocation3]
    $region5: #{mlp_forward.1} parent=1 // pred_fallthru
      _
    // Predicated region
    $region6: #{mlp_forward.1} parent=1 // pred_check
      _
    $region7: #{mlp_forward.1} parent=1 // pred_check_branch
      %34 = sbr.rel (0) target = $region9
    $region8: #{mlp_forward.1} parent=1 // pred_region
      _
    $region9: #{mlp_forward.1} parent=1 // pred_fallthru
      _
    // Predicated region
    $region10: #{mlp_forward.1} parent=1 // pred_check
      _
    $region11: #{mlp_forward.1} parent=1 // pred_check_branch
      %36 = sbr.rel (0) target = $region13
    $region12: #{mlp_forward.1} parent=1 // pred_region
      _
    $region13: #{mlp_forward.1} parent=1 // pred_fallthru
      _
    // Predicated region
    $region14: #{mlp_forward.1} parent=1 // pred_check
      _
    $region15: #{mlp_forward.1} parent=1 // pred_check_branch
      %38 = sbr.rel (0) target = $region17
    $region16: #{mlp_forward.1} parent=1 // pred_region
      _
    $region17: #{mlp_forward.1} parent=1 // pred_fallthru
      _
    // Predicated region
    $region18: #{mlp_forward.1} parent=1 // pred_check
      _
    $region19: #{mlp_forward.1} parent=1 // pred_check_branch
      %40 = sbr.rel (0) target = $region21
    $region20: #{mlp_forward.1} parent=1 // pred_region
      _
    $region21: #{mlp_forward.1} parent=1 // pred_fallthru
      _
    // Predicated region
    $region22: #{mlp_forward.1} parent=1 // pred_check
      _
    $region23: #{mlp_forward.1} parent=1 // pred_check_branch
      %42 = sbr.rel (0) target = $region25
    $region24: #{mlp_forward.1} parent=1 // pred_region
      _
    $region25: #{mlp_forward.1} parent=1 // pred_fallthru
      _
    // Predicated region
    $region26: #{mlp_forward.1} parent=1 // pred_check
      _
    $region27: #{mlp_forward.1} parent=1 // pred_check_branch
      %44 = sbr.rel (0) target = $region29
    $region28: #{mlp_forward.1} parent=1 // pred_region
      %s46 = ssub.s32 16, 16
      %47 = vsyncadd [#allocation6], %s46
      %s49 = sshll.u32 [#allocation5], 4
      %s50 = int_to_ptr.vmem [resolvable:$true] %s49
      %52 = dma.hbm_to_vmem [thread:$0]  %s6, 16, %s50, [#allocation6]
    $region29: #{mlp_forward.1} parent=1 // pred_fallthru
      _
    // Predicated region
    $region30: #{mlp_forward.1} parent=1 // pred_check
      _
    $region31: #{mlp_forward.1} parent=1 // pred_check_branch
      %54 = sbr.rel (0) target = $region33
    $region32: #{mlp_forward.1} parent=1 // pred_region
      _
    $region33: #{mlp_forward.1} parent=1 // pred_fallthru
      _
    // Predicated region
    $region34: #{mlp_forward.1} parent=1 // pred_check
      _
    $region35: #{mlp_forward.1} parent=1 // pred_check_branch
      %56 = sbr.rel (0) target = $region37
    $region36: #{mlp_forward.1} parent=1 // pred_region
      %s58 = ssub.s32 16, 16
      %59 = vsyncadd [#allocation6], %s58
      %s61 = sshll.u32 [#allocation7], 4
      %s62 = int_to_ptr.vmem [resolvable:$true] %s61
      %64 = dma.hbm_to_vmem [thread:$0]  %s8, 16, %s62, [#allocation6]
    $region37: #{mlp_forward.1} parent=1 // pred_fallthru
      _
    // Predicated region
    $region38: #{mlp_forward.1} parent=1 // pred_check
      _
    $region39: #{mlp_forward.1} parent=1 // pred_check_branch
      %66 = sbr.rel (0) target = $region41
    $region40: #{mlp_forward.1} parent=1 // pred_region
      %s68 = ssub.s32 256, 256
      %69 = vsyncadd [#allocation9], %s68
      %s70 = sshll.u32 [#allocation8], 4
      %s71 = int_to_ptr.vmem [resolvable:$true] %s70
      %76 = dma.hbm_to_vmem [thread:$0]  %s9, 256, %s71, [#allocation9], 64, 64, 4
    $region41: #{mlp_forward.1} parent=1 // pred_fallthru
      _
    // Predicated region
    $region42: #{mlp_forward.1} parent=1 // pred_check
      _
    $region43: #{mlp_forward.1} parent=1 // pred_check_branch
      %78 = sbr.rel (0) target = $region45
    $region44: #{mlp_forward.1} parent=1 // pred_region
      %s80 = ssub.s32 16, 16
      %81 = vsyncadd [#allocation9], %s80
      %s83 = sshll.u32 [#allocation10], 4
      %s84 = int_to_ptr.vmem [resolvable:$true] %s83
      %86 = dma.hbm_to_vmem [thread:$0]  %s10, 16, %s84, [#allocation9]
    $region45: #{mlp_forward.1} parent=1 // pred_fallthru
      _
    // Predicated region
    $region46: #{mlp_forward.1} parent=1 // pred_check
      _
    $region47: #{mlp_forward.1} parent=1 // pred_check_branch
      %88 = sbr.rel (0) target = $region49
    $region48: #{mlp_forward.1} parent=1 // pred_region
      %89 = dma.done [#allocation3], 128
    $region49: #{mlp_forward.1} parent=1 // pred_fallthru
      _
    // Predicated region
    $region50: #{mlp_forward.1} parent=1 // pred_check
      _
    $region51: #{mlp_forward.1} parent=1 // pred_check_branch
      %91 = sbr.rel (0) target = $region53
    $region52: #{mlp_forward.1} parent=1 // pred_region
      %92 = dma.done [#allocation6], 16
    $region53: #{mlp_forward.1} parent=1 // pred_fallthru
      _
    // Predicated region
    $region54: #{mlp_forward.1} parent=1 // pred_check
      _
    $region55: #{mlp_forward.1} parent=1 // pred_check_branch
      %94 = sbr.rel (0) target = $region57
    $region56: #{mlp_forward.1} parent=1 // pred_region
      %95 = dma.done [#allocation6], 16
    $region57: #{mlp_forward.1} parent=1 // pred_fallthru
      _
    // Predicated region
    $region58: #{mlp_forward.1} parent=1 // pred_check
      _
    $region59: #{mlp_forward.1} parent=1 // pred_check_branch
      %97 = sbr.rel (0) target = $region61
    $region60: #{mlp_forward.1} parent=1 // pred_region
      %98 = dma.done [#allocation9], 256
    $region61: #{mlp_forward.1} parent=1 // pred_fallthru
      _
    // Predicated region
    $region62: #{mlp_forward.1} parent=1 // pred_check
      _
    $region63: #{mlp_forward.1} parent=1 // pred_check_branch
      %100 = sbr.rel (0) target = $region65
    $region64: #{mlp_forward.1} parent=1 // pred_region
      %101 = dma.done [#allocation9], 16
    $region65: #{mlp_forward.1} parent=1 // pred_fallthru
      _
    %v103 = vld [vmem:[#allocation2] sm:$0xff]
    %v104 = vpack.c.bf16 %v103, %v103
    %v105 = vld [vmem:[%s1] sm:$0xf]
    %v106 = vld [vmem:[%s1 + $0x4] sm:$0xf]
    %v107 = vld [vmem:[%s1 + $0x8] sm:$0xf]
    %v108 = vld [vmem:[%s1 + $0xc] sm:$0xf]
    %v109 = vld [vmem:[%s2] sm:$0x1]
    %v111 = vlaneseq
    %v112 = vshrl.u32 %v111, 7
    %v113 = vsub.s32 0, %v112
    %v114 = vrot.slane %v109, %v113
    %v120 = vunpack.c.l.b16 %v105
    %v121 = vunpack.c.l.b16 %v106
    %v122 = vunpack.c.l.b16 %v107
    %v123 = vunpack.c.l.b16 %v108
    %v124 = vpack.c.b16 %v121, %v120
    %v125 = vpack.c.b16 %v123, %v122
    %vm128 = vcmask 261120
    %v130 = vsel %vm128, %v104, 0
    %132 = vmatprep.subr.bf16.mxu0 0
    %133 = vmatpush1.bf16.msra.mxu0 %v124
    %134 = vmatprep.subr.bf16.mxu0 0
    %135 = vmatpush1.bf16.msra.mxu0 %v125
    %136 = vmatprep.subr.bf16.mxu0 0
    %137 = vmatpush1.bf16.msra.mxu0 0
    %138 = vmatprep.subr.bf16.mxu0 0
    %139 = vmatpush1.bf16.msra.mxu0 0
    %140 = vmatprep.subr.bf16.mxu0 0
    %141 = vmatpush1.bf16.msra.mxu0 0
    %142 = vmatprep.subr.bf16.mxu0 0
    %143 = vmatpush1.bf16.msra.mxu0 0
    %144 = vmatprep.subr.bf16.mxu0 0
    %145 = vmatpush1.bf16.msra.mxu0 0
    %146 = vmatprep.subr.bf16.mxu0 0
    %147 = vmatpush1.bf16.msra.mxu0 0
    %148 = vmatprep.subr.bf16.mxu0 0
    %149 = vmatpush1.bf16.msra.mxu0 0
    %150 = vmatprep.subr.bf16.mxu0 0
    %151 = vmatpush1.bf16.msra.mxu0 0
    %152 = vmatprep.subr.bf16.mxu0 0
    %153 = vmatpush1.bf16.msra.mxu0 0
    %154 = vmatprep.subr.bf16.mxu0 0
    %155 = vmatpush1.bf16.msra.mxu0 0
    %156 = vmatprep.subr.bf16.mxu0 0
    %157 = vmatpush1.bf16.msra.mxu0 0
    %158 = vmatprep.subr.bf16.mxu0 0
    %159 = vmatpush1.bf16.msra.mxu0 0
    %160 = vmatprep.subr.bf16.mxu0 0
    %161 = vmatpush1.bf16.msra.mxu0 0
    %162 = vmatprep.subr.bf16.mxu0 0
    %163 = vmatpush1.bf16.msra.mxu0 0
    %164 = vmatprep.mubr.bf16.mxu0 0
    %165 = vmatmul.mubr.bf16.gmra.mrb[0].mxu0 %v130
    %v166 = vpop.f32.mrb[0].mxu0
    %v167 = vadd.f32 %v114, %v166
    %v168 = vpop.f32.mrb[0].mxu0
    %v169 = vpop.f32.mrb[0].mxu0
    %v170 = vpop.f32.mrb[0].mxu0
    %171 = vdwg.mxu0
    %v172 = vmax.f32 %v167, 0.0
    %v173 = vpack.c.bf16 %v172, %v172
    %v174 = vld [vmem:[%s3] sm:$0xf]
    %v175 = vld [vmem:[%s3 + $0x4] sm:$0xf]
    %v176 = vld [vmem:[%s3 + $0x8] sm:$0xf]
    %v177 = vld [vmem:[%s3 + $0xc] sm:$0xf]
    %v178 = vld [vmem:[%s3 + $0x10] sm:$0xf]
    %v179 = vld [vmem:[%s3 + $0x14] sm:$0xf]
    %v180 = vld [vmem:[%s3 + $0x18] sm:$0xf]
    %v181 = vld [vmem:[%s3 + $0x1c] sm:$0xf]
    %v182 = vld [vmem:[%s4] sm:$0x1]
    %v184 = vlaneseq
    %v185 = vshrl.u32 %v184, 7
    %v186 = vsub.s32 0, %v185
    %v187 = vrot.slane %v182, %v186
    %v197 = vunpack.c.l.b16 %v174
    %v198 = vunpack.c.l.b16 %v175
    %v199 = vunpack.c.l.b16 %v176
    %v200 = vunpack.c.l.b16 %v177
    %v201 = vunpack.c.l.b16 %v178
    %v202 = vunpack.c.l.b16 %v179
    %v203 = vunpack.c.l.b16 %v180
    %v204 = vunpack.c.l.b16 %v181
    %v205 = vpack.c.b16 %v198, %v197
    %v206 = vpack.c.b16 %v200, %v199
    %v207 = vpack.c.b16 %v202, %v201
    %v208 = vpack.c.b16 %v204, %v203
    %vm213 = vcmask 523264
    %v215 = vsel %vm213, %v173, 0
    %217 = vmatprep.subr.bf16.mxu0 0
    %218 = vmatpush1.bf16.msra.mxu0 %v205
    %219 = vmatprep.subr.bf16.mxu0 0
    %220 = vmatpush1.bf16.msra.mxu0 %v206
    %221 = vmatprep.subr.bf16.mxu0 0
    %222 = vmatpush1.bf16.msra.mxu0 %v207
    %223 = vmatprep.subr.bf16.mxu0 0
    %224 = vmatpush1.bf16.msra.mxu0 %v208
    %225 = vmatprep.subr.bf16.mxu0 0
    %226 = vmatpush1.bf16.msra.mxu0 0
    %227 = vmatprep.subr.bf16.mxu0 0
    %228 = vmatpush1.bf16.msra.mxu0 0
    %229 = vmatprep.subr.bf16.mxu0 0
    %230 = vmatpush1.bf16.msra.mxu0 0
    %231 = vmatprep.subr.bf16.mxu0 0
    %232 = vmatpush1.bf16.msra.mxu0 0
    %233 = vmatprep.subr.bf16.mxu0 0
    %234 = vmatpush1.bf16.msra.mxu0 0
    %235 = vmatprep.subr.bf16.mxu0 0
    %236 = vmatpush1.bf16.msra.mxu0 0
    %237 = vmatprep.subr.bf16.mxu0 0
    %238 = vmatpush1.bf16.msra.mxu0 0
    %239 = vmatprep.subr.bf16.mxu0 0
    %240 = vmatpush1.bf16.msra.mxu0 0
    %241 = vmatprep.subr.bf16.mxu0 0
    %242 = vmatpush1.bf16.msra.mxu0 0
    %243 = vmatprep.subr.bf16.mxu0 0
    %244 = vmatpush1.bf16.msra.mxu0 0
    %245 = vmatprep.subr.bf16.mxu0 0
    %246 = vmatpush1.bf16.msra.mxu0 0
    %247 = vmatprep.subr.bf16.mxu0 0
    %248 = vmatpush1.bf16.msra.mxu0 0
    %249 = vmatprep.mubr.bf16.mxu0 0
    %250 = vmatmul.mubr.bf16.gmra.mrb[0].mxu0 %v215
    %v251 = vpop.f32.mrb[0].mxu0
    %v252 = vadd.f32 %v187, %v251
    %v253 = vpop.f32.mrb[0].mxu0
    %v254 = vpop.f32.mrb[0].mxu0
    %v255 = vpop.f32.mrb[0].mxu0
    %256 = vdwg.mxu0
    %v257 = vmax.f32 %v252, 0.0
    %v258 = vpack.c.bf16 %v257, %v257
    %v259 = vld [vmem:[%s5] sm:$0xf]
    %v260 = vld [vmem:[%s5 + $0x4] sm:$0xf]
    %v261 = vld [vmem:[%s5 + $0x8] sm:$0xf]
    %v262 = vld [vmem:[%s5 + $0xc] sm:$0xf]
    %v263 = vld [vmem:[%s5 + $0x10] sm:$0xf]
    %v264 = vld [vmem:[%s5 + $0x14] sm:$0xf]
    %v265 = vld [vmem:[%s5 + $0x18] sm:$0xf]
    %v266 = vld [vmem:[%s5 + $0x1c] sm:$0xf]
    %v267 = vld [vmem:[#allocation5] sm:$0x1]
    %v269 = vlaneseq
    %v270 = vshrl.u32 %v269, 7
    %v271 = vsub.s32 0, %v270
    %v272 = vrot.slane %v267, %v271
    %v282 = vunpack.c.l.b16 %v259
    %v283 = vunpack.c.l.b16 %v260
    %v284 = vunpack.c.l.b16 %v261
    %v285 = vunpack.c.l.b16 %v262
    %v286 = vunpack.c.l.b16 %v263
    %v287 = vunpack.c.l.b16 %v264
    %v288 = vunpack.c.l.b16 %v265
    %v289 = vunpack.c.l.b16 %v266
    %v290 = vpack.c.b16 %v283, %v282
    %v291 = vpack.c.b16 %v285, %v284
    %v292 = vpack.c.b16 %v287, %v286
    %v293 = vpack.c.b16 %v289, %v288
    %v299 = vsel %vm213, %v258, 0
    %301 = vmatprep.subr.bf16.mxu0 0
    %302 = vmatpush1.bf16.msra.mxu0 %v290
    %303 = vmatprep.subr.bf16.mxu0 0
    %304 = vmatpush1.bf16.msra.mxu0 %v291
    %305 = vmatprep.subr.bf16.mxu0 0
    %306 = vmatpush1.bf16.msra.mxu0 %v292
    %307 = vmatprep.subr.bf16.mxu0 0
    %308 = vmatpush1.bf16.msra.mxu0 %v293
    %309 = vmatprep.subr.bf16.mxu0 0
    %310 = vmatpush1.bf16.msra.mxu0 0
    %311 = vmatprep.subr.bf16.mxu0 0
    %312 = vmatpush1.bf16.msra.mxu0 0
    %313 = vmatprep.subr.bf16.mxu0 0
    %314 = vmatpush1.bf16.msra.mxu0 0
    %315 = vmatprep.subr.bf16.mxu0 0
    %316 = vmatpush1.bf16.msra.mxu0 0
    %317 = vmatprep.subr.bf16.mxu0 0
    %318 = vmatpush1.bf16.msra.mxu0 0
    %319 = vmatprep.subr.bf16.mxu0 0
    %320 = vmatpush1.bf16.msra.mxu0 0
    %321 = vmatprep.subr.bf16.mxu0 0
    %322 = vmatpush1.bf16.msra.mxu0 0
    %323 = vmatprep.subr.bf16.mxu0 0
    %324 = vmatpush1.bf16.msra.mxu0 0
    %325 = vmatprep.subr.bf16.mxu0 0
    %326 = vmatpush1.bf16.msra.mxu0 0
    %327 = vmatprep.subr.bf16.mxu0 0
    %328 = vmatpush1.bf16.msra.mxu0 0
    %329 = vmatprep.subr.bf16.mxu0 0
    %330 = vmatpush1.bf16.msra.mxu0 0
    %331 = vmatprep.subr.bf16.mxu0 0
    %332 = vmatpush1.bf16.msra.mxu0 0
    %333 = vmatprep.mubr.bf16.mxu0 0
    %334 = vmatmul.mubr.bf16.gmra.mrb[0].mxu0 %v299
    %v335 = vpop.f32.mrb[0].mxu0
    %v336 = vadd.f32 %v272, %v335
    %v337 = vpop.f32.mrb[0].mxu0
    %v338 = vpop.f32.mrb[0].mxu0
    %v339 = vpop.f32.mrb[0].mxu0
    %340 = vdwg.mxu0
    %v341 = vmax.f32 %v336, 0.0
    %v342 = vpack.c.bf16 %v341, %v341
    %v343 = vld [vmem:[%s7] sm:$0xf]
    %v344 = vld [vmem:[%s7 + $0x4] sm:$0xf]
    %v345 = vld [vmem:[%s7 + $0x8] sm:$0xf]
    %v346 = vld [vmem:[%s7 + $0xc] sm:$0xf]
    %v347 = vld [vmem:[#allocation7] sm:$0x1]
    %v349 = vlaneseq
    %v350 = vshrl.u32 %v349, 7
    %v351 = vsub.s32 0, %v350
    %v352 = vrot.slane %v347, %v351
    %v358 = vunpack.c.l.b16 %v343
    %v359 = vunpack.c.l.b16 %v344
    %v360 = vunpack.c.l.b16 %v345
    %v361 = vunpack.c.l.b16 %v346
    %v362 = vpack.c.b16 %v359, %v358
    %v363 = vpack.c.b16 %v361, %v360
    %v367 = vsel %vm128, %v342, 0
    %369 = vmatprep.subr.bf16.mxu0 0
    %370 = vmatpush1.bf16.msra.mxu0 %v362
    %371 = vmatprep.subr.bf16.mxu0 0
    %372 = vmatpush1.bf16.msra.mxu0 %v363
    %373 = vmatprep.subr.bf16.mxu0 0
    %374 = vmatpush1.bf16.msra.mxu0 0
    %375 = vmatprep.subr.bf16.mxu0 0
    %376 = vmatpush1.bf16.msra.mxu0 0
    %377 = vmatprep.subr.bf16.mxu0 0
    %378 = vmatpush1.bf16.msra.mxu0 0
    %379 = vmatprep.subr.bf16.mxu0 0
    %380 = vmatpush1.bf16.msra.mxu0 0
    %381 = vmatprep.subr.bf16.mxu0 0
    %382 = vmatpush1.bf16.msra.mxu0 0
    %383 = vmatprep.subr.bf16.mxu0 0
    %384 = vmatpush1.bf16.msra.mxu0 0
    %385 = vmatprep.subr.bf16.mxu0 0
    %386 = vmatpush1.bf16.msra.mxu0 0
    %387 = vmatprep.subr.bf16.mxu0 0
    %388 = vmatpush1.bf16.msra.mxu0 0
    %389 = vmatprep.subr.bf16.mxu0 0
    %390 = vmatpush1.bf16.msra.mxu0 0
    %391 = vmatprep.subr.bf16.mxu0 0
    %392 = vmatpush1.bf16.msra.mxu0 0
    %393 = vmatprep.subr.bf16.mxu0 0
    %394 = vmatpush1.bf16.msra.mxu0 0
    %395 = vmatprep.subr.bf16.mxu0 0
    %396 = vmatpush1.bf16.msra.mxu0 0
    %397 = vmatprep.subr.bf16.mxu0 0
    %398 = vmatpush1.bf16.msra.mxu0 0
    %399 = vmatprep.subr.bf16.mxu0 0
    %400 = vmatpush1.bf16.msra.mxu0 0
    %401 = vmatprep.mubr.bf16.mxu0 0
    %402 = vmatmul.mubr.bf16.gmra.mrb[0].mxu0 %v367
    %v403 = vpop.f32.mrb[0].mxu0
    %v404 = vadd.f32 %v352, %v403
    %v405 = vpop.f32.mrb[0].mxu0
    %v406 = vpop.f32.mrb[0].mxu0
    %v407 = vpop.f32.mrb[0].mxu0
    %408 = vdwg.mxu0
    %v409 = vmax.f32 %v404, 0.0
    %v410 = vpack.c.bf16 %v409, %v409
    %v411 = vld [vmem:[#allocation8] sm:$0xf]
    %v412 = vld [vmem:[#allocation8 + $0x4] sm:$0xf]
    %v413 = vld [vmem:[#allocation8 + $0x8] sm:$0xf]
    %v414 = vld [vmem:[#allocation8 + $0xc] sm:$0xf]
    %v415 = vld [vmem:[#allocation10] sm:$0x1]
    %v417 = vlaneseq
    %v418 = vshrl.u32 %v417, 7
    %v419 = vsub.s32 0, %v418
    %v420 = vrot.slane %v415, %v419
    %v426 = vunpack.c.l.b16 %v411
    %v427 = vunpack.c.l.b16 %v412
    %v428 = vunpack.c.l.b16 %v413
    %v429 = vunpack.c.l.b16 %v414
    %v430 = vpack.c.b16 %v427, %v426
    %v431 = vpack.c.b16 %v429, %v428
    %v435 = vsel %vm128, %v410, 0
    %437 = vmatprep.subr.bf16.mxu0 0
    %438 = vmatpush1.bf16.msra.mxu0 %v430
    %439 = vmatprep.subr.bf16.mxu0 0
    %440 = vmatpush1.bf16.msra.mxu0 %v431
    %441 = vmatprep.subr.bf16.mxu0 0
    %442 = vmatpush1.bf16.msra.mxu0 0
    %443 = vmatprep.subr.bf16.mxu0 0
    %444 = vmatpush1.bf16.msra.mxu0 0
    %445 = vmatprep.subr.bf16.mxu0 0
    %446 = vmatpush1.bf16.msra.mxu0 0
    %447 = vmatprep.subr.bf16.mxu0 0
    %448 = vmatpush1.bf16.msra.mxu0 0
    %449 = vmatprep.subr.bf16.mxu0 0
    %450 = vmatpush1.bf16.msra.mxu0 0
    %451 = vmatprep.subr.bf16.mxu0 0
    %452 = vmatpush1.bf16.msra.mxu0 0
    %453 = vmatprep.subr.bf16.mxu0 0
    %454 = vmatpush1.bf16.msra.mxu0 0
    %455 = vmatprep.subr.bf16.mxu0 0
    %456 = vmatpush1.bf16.msra.mxu0 0
    %457 = vmatprep.subr.bf16.mxu0 0
    %458 = vmatpush1.bf16.msra.mxu0 0
    %459 = vmatprep.subr.bf16.mxu0 0
    %460 = vmatpush1.bf16.msra.mxu0 0
    %461 = vmatprep.subr.bf16.mxu0 0
    %462 = vmatpush1.bf16.msra.mxu0 0
    %463 = vmatprep.subr.bf16.mxu0 0
    %464 = vmatpush1.bf16.msra.mxu0 0
    %465 = vmatprep.subr.bf16.mxu0 0
    %466 = vmatpush1.bf16.msra.mxu0 0
    %467 = vmatprep.subr.bf16.mxu0 0
    %468 = vmatpush1.bf16.msra.mxu0 0
    %469 = vmatprep.mubr.bf16.mxu0 0
    %470 = vmatmul.mubr.bf16.gmra.mrb[0].mxu0 %v435
    %v471 = vpop.f32.mrb[0].mxu0
    %v472 = vadd.f32 %v420, %v471
    %v473 = vpop.f32.mrb[0].mxu0
    %v474 = vpop.f32.mrb[0].mxu0
    %v475 = vpop.f32.mrb[0].mxu0
    %476 = vdwg.mxu0
    %477 = vst [vmem:[#allocation11] sm:$0xff] %v472
    %v478 = vlaneseq
    %v479 = vand.u32 %v478, 127
    %vm480 = vcmp.lt.s32.totalorder %v479, 10
    %v481 = vsel %vm480, %v472, -1e+30
    %482 = vmax.xlane.f32.xlu0 %v481
    %v483 = vpop.xlane.xlu0 %482
    %v484 = vsub.f32 %v481, %v483
    %v485 = vmul.f32 %v484, 1.442695
    %v486 = vpow.pop %v485
    %v487 = vsel %vm480, %v486, 0.0
    %488 = vadd.xlane.f32.xlu0 %v487
    %v489 = vpop.xlane.xlu0 %488
    %v490 = vrcp.pop %v489
    %v491 = vmul.f32 %v487, %v490
    %492 = vst [vmem:[#allocation12] sm:$0xff] %v491
    // Predicated region
    $region66: #{mlp_forward.1} parent=1 // pred_check
      _
    $region67: #{mlp_forward.1} parent=1 // pred_check_branch
      %494 = sbr.rel (0) target = $region69
    $region68: #{mlp_forward.1} parent=1 // pred_region
      %s496 = ssub.s32 128, 128
      %497 = vsyncadd [#allocation4], %s496
      %s499 = sshll.u32 [#allocation11], 4
      %s500 = int_to_ptr.vmem [resolvable:$true] %s499
      %502 = dma.vmem_to_hbm [thread:$0]  %s500, 128, %s11, [#allocation4]
    $region69: #{mlp_forward.1} parent=1 // pred_fallthru
      _
    // Predicated region
    $region70: #{mlp_forward.1} parent=1 // pred_check
      _
    $region71: #{mlp_forward.1} parent=1 // pred_check_branch
      %504 = sbr.rel (0) target = $region73
    $region72: #{mlp_forward.1} parent=1 // pred_region
      %s506 = ssub.s32 128, 128
      %507 = vsyncadd [#allocation13], %s506
      %s509 = sshll.u32 [#allocation12], 4
      %s510 = int_to_ptr.vmem [resolvable:$true] %s509
      %512 = dma.vmem_to_hbm [thread:$0]  %s510, 128, %s12, [#allocation13]
    $region73: #{mlp_forward.1} parent=1 // pred_fallthru
      _
    // Predicated region
    $region74: #{mlp_forward.1} parent=1 // pred_check
      _
    $region75: #{mlp_forward.1} parent=1 // pred_check_branch
      %514 = sbr.rel (0) target = $region77
    $region76: #{mlp_forward.1} parent=1 // pred_region
      %515 = dma.done [#allocation4], 128
    $region77: #{mlp_forward.1} parent=1 // pred_fallthru
      _
    // Predicated region
    $region78: #{mlp_forward.1} parent=1 // pred_check
      _
    $region79: #{mlp_forward.1} parent=1 // pred_check_branch
      %517 = sbr.rel (0) target = $region81
    $region80: #{mlp_forward.1} parent=1 // pred_region
      %518 = dma.done [#allocation13], 128
    $region81: #{mlp_forward.1} parent=1 // pred_fallthru
      _
    %519 = vsyncpa [#allocation3], 1
    %520 = vsyncpa [#allocation6], 1
    %521 = vsyncpa [#allocation9], 1
    %522 = vsyncpa [#allocation4], 1
    %523 = vsyncpa [#allocation13], 1

</llo_original>
